<compile_context>
chip_gen: v5e
topology: v5e:2x2
jax: 0.10.0
libtpu: 0.0.40
codegen_flags: <defaults>
</compile_context>

<pallas_src>
import jax
import jax.numpy as jnp
from jax.experimental import pallas as pl
from jax.experimental.pallas import tpu as pltpu


# ----------------------------------------------------------------------------
# Pallas kernel: fused (hidden @ W) -> log-softmax -> target gather -> masked
# partial sums.  Each grid step handles one tile of `tile_n` tokens and writes
# its partial numerator / denominator into a lane-dense (1, 8, 128) block.
# ----------------------------------------------------------------------------
def _lm_criterion_kernel(x_ref, w_ref, tgt_ref, mask_ref, num_ref, den_ref):
    # (TN, H) bf16 @ (H, V) bf16 -> (TN, V) f32 on the MXU.
    logits = jnp.dot(x_ref[...], w_ref[...], preferred_element_type=jnp.float32)

    # Numerically stable logsumexp along the vocab (lane) axis.
    m = jnp.max(logits, axis=-1, keepdims=True)                   # (TN, 1)
    lse = jnp.log(jnp.sum(jnp.exp(logits - m), axis=-1, keepdims=True)) + m

    # Target logit via one-hot select — do NOT materialize logits - lse.
    tgt = tgt_ref[...]                                            # (TN, 1) i32
    lane = jax.lax.broadcasted_iota(jnp.int32, logits.shape, 1)   # (TN, V)
    tgt_logit = jnp.sum(jnp.where(lane == tgt, logits, 0.0),
                        axis=-1, keepdims=True)                   # (TN, 1)

    msk = mask_ref[...]                                           # (TN, 1) f32
    nll = (lse - tgt_logit) * msk                                 # -logp[tgt]*mask

    # Per-tile partials, broadcast to a lane-dense block (unmasked store).
    num_ref[...] = jnp.broadcast_to(jnp.sum(nll), num_ref.shape)
    den_ref[...] = jnp.broadcast_to(jnp.sum(msk), den_ref.shape)


def lm_criterion_pallas(x, w, tgt, mask, *, tile_n=256):
    """x: (N, H) bf16, w: (H, V) bf16, tgt: (N, 1) i32, mask: (N, 1) f32.

    Returns (num, den) scalars: sum(-logp[target]*mask), sum(mask).
    """
    N, H = x.shape
    V = w.shape[1]

    # Pad the token axis so the grid tiles evenly.  Padded rows have mask=0 and
    # target=0 (valid index), so they contribute nothing.
    pad = (-N) % tile_n
    if pad:
        x = jnp.pad(x, ((0, pad), (0, 0)))
        tgt = jnp.pad(tgt, ((0, pad), (0, 0)))
        mask = jnp.pad(mask, ((0, pad), (0, 0)))
    Np = N + pad
    G = Np // tile_n

    # VMEM budget: bf16 weight (double-buffered, constant index_map so only one
    # DMA is issued), bf16 x tiles (double-buffered), f32 logits temporary,
    # tgt/mask tiles (lane-padded), partial outputs — plus 25% headroom.
    vmem_bytes = (
        2 * H * V * 2
        + 2 * tile_n * H * 2
        + tile_n * V * 4
        + 2 * 2 * tile_n * 128 * 4
        + 4 * 8 * 128 * 4
    )
    vmem_limit = min(64 * 1024 * 1024,
                     max(32 * 1024 * 1024, int(vmem_bytes * 1.25)))

    cost = pl.CostEstimate(
        flops=2 * Np * H * V,
        transcendentals=Np * V,
        bytes_accessed=(Np * H * 2 + H * V * 2 + Np * 4 + Np * 4
                        + 2 * G * 8 * 128 * 4),
    )

    num_p, den_p = pl.pallas_call(
        _lm_criterion_kernel,
        out_shape=(jax.ShapeDtypeStruct((G, 8, 128), jnp.float32),
                   jax.ShapeDtypeStruct((G, 8, 128), jnp.float32)),
        grid_spec=pltpu.PrefetchScalarGridSpec(
            num_scalar_prefetch=0,
            grid=(G,),
            in_specs=[
                pl.BlockSpec((tile_n, H), lambda i: (i, 0)),   # hidden states
                pl.BlockSpec((H, V), lambda i: (0, 0)),        # proj weight (resident)
                pl.BlockSpec((tile_n, 1), lambda i: (i, 0)),   # target ids
                pl.BlockSpec((tile_n, 1), lambda i: (i, 0)),   # token mask
            ],
            out_specs=[
                pl.BlockSpec((1, 8, 128), lambda i: (i, 0, 0)),
                pl.BlockSpec((1, 8, 128), lambda i: (i, 0, 0)),
            ],
        ),
        compiler_params=pltpu.CompilerParams(
            dimension_semantics=("parallel",),   # independent token tiles
            vmem_limit_bytes=vmem_limit),
        cost_estimate=cost,
    )(x, w, tgt, mask)

    num = jnp.sum(num_p[:, 0, 0])
    den = jnp.sum(den_p[:, 0, 0])
    return num, den


# ----------------------------------------------------------------------------
# LossWrapper.forward (sc_flag = False branch)
# ----------------------------------------------------------------------------
def loss_wrapper_forward(params, fc_feats, att_feats, iod_feats,
                         labels, masks, att_masks, iod_masks,
                         gts=None, gt_indices=None, sc_flag=False):
    if sc_flag:
        raise NotImplementedError(
            "sc_flag=True (sampling + RewardCriterion) not implemented")

    labels_in = labels[..., :-1]       # model input tokens  (B, L)
    targets = labels[..., 1:]          # criterion targets   (B, L)
    mask = masks[..., 1:]              # criterion mask      (B, L)

    # ---- synthetic language model (glue, plain JAX); keep activations bf16 ----
    emb = params["embed"][labels_in]                    # (B, L, H)
    hidden = (emb + fc_feats[:, None, :]).astype(jnp.bfloat16)
    B, L, H = hidden.shape
    N = B * L

    x = hidden.reshape(N, H)                            # bf16 matmul operand
    tgt = targets.reshape(N, 1).astype(jnp.int32)
    msk = mask.reshape(N, 1).astype(jnp.float32)
    w = params["proj"].astype(jnp.bfloat16)             # bf16 matmul operand

    # ---- Pallas hot path: projection + log-softmax + gather + masked sums ----
    num, den = lm_criterion_pallas(x, w, tgt, msk)
    loss = num / den

    return {"loss": loss}


# ----------------------------------------------------------------------------
# pure-JAX references for sanity checks
# ----------------------------------------------------------------------------
def _reference_loss_f32(params, fc_feats, labels, masks):
    labels_in = labels[..., :-1]
    targets = labels[..., 1:]
    mask = masks[..., 1:].astype(jnp.float32)
    hidden = params["embed"][labels_in] + fc_feats[:, None, :]
    logits = jnp.einsum("blh,hv->blv", hidden, params["proj"])
    logprobs = jax.nn.log_softmax(logits, axis=-1)
    tgt_lp = jnp.take_along_axis(logprobs, targets[..., None], axis=-1)[..., 0]
    return jnp.sum(-tgt_lp * mask) / jnp.sum(mask)


def _reference_loss_bf16(params, fc_feats, labels, masks):
    # Same math, but with bf16 matmul operands / f32 accumulation — mirrors the
    # kernel's arithmetic for a tight comparison.
    labels_in = labels[..., :-1]
    targets = labels[..., 1:]
    mask = masks[..., 1:].astype(jnp.float32)
    hidden = (params["embed"][labels_in] + fc_feats[:, None, :]).astype(jnp.bfloat16)
    w = params["proj"].astype(jnp.bfloat16)
    logits = jnp.einsum("blh,hv->blv", hidden, w,
                        preferred_element_type=jnp.float32)
    logprobs = jax.nn.log_softmax(logits, axis=-1)
    tgt_lp = jnp.take_along_axis(logprobs, targets[..., None], axis=-1)[..., 0]
    return jnp.sum(-tgt_lp * mask) / jnp.sum(mask)


if __name__ == "__main__":
    key = jax.random.PRNGKey(0)
    k_emb, k_proj, k_fc, k_att, k_iod, k_lab, k_msk = jax.random.split(key, 7)

    B, Lp1, H, V = 2, 9, 32, 128      # labels length 9 -> 8 prediction steps
    NUM_ATT = 4

    params = {
        "embed": jax.random.normal(k_emb, (V, H), jnp.float32) * 0.1,
        "proj": jax.random.normal(k_proj, (H, V), jnp.float32) * 0.1,
    }

    fc_feats = jax.random.normal(k_fc, (B, H), jnp.float32)
    att_feats = jax.random.normal(k_att, (B, NUM_ATT, H), jnp.float32)
    iod_feats = jax.random.normal(k_iod, (B, NUM_ATT, H), jnp.float32)
    labels = jax.random.randint(k_lab, (B, Lp1), 0, V, jnp.int32)
    masks = (jax.random.uniform(k_msk, (B, Lp1)) > 0.2).astype(jnp.float32)
    masks = masks.at[:, 0].set(1.0)   # ensure nonzero mask sum
    att_masks = jnp.ones((B, NUM_ATT), jnp.float32)
    iod_masks = jnp.ones((B, NUM_ATT), jnp.float32)

    out = loss_wrapper_forward(params, fc_feats, att_feats, iod_feats,
                               labels, masks, att_masks, iod_masks,
                               sc_flag=False)
    loss = jax.block_until_ready(out["loss"])

    ref_bf16 = _reference_loss_bf16(params, fc_feats, labels, masks)
    ref_f32 = _reference_loss_f32(params, fc_feats, labels, masks)
    assert jnp.allclose(loss, ref_bf16, rtol=5e-3, atol=5e-3), (loss, ref_bf16)
    assert jnp.allclose(loss, ref_f32, rtol=5e-2, atol=5e-2), (loss, ref_f32)

    print("KERNEL_OK")
</pallas_src>

<mosaic_0001>
module attributes {stable_mosaic.version = 11 : i64} {
  func.func @_lm_criterion_kernel(%arg0: i32, %arg1: memref<256x32xbf16, #tpu.memory_space<vmem>>, %arg2: memref<32x128xbf16, #tpu.memory_space<vmem>>, %arg3: memref<256x1xi32, #tpu.memory_space<vmem>>, %arg4: memref<256x1xf32, #tpu.memory_space<vmem>>, %arg5: memref<1x8x128xf32, #tpu.memory_space<vmem>>, %arg6: memref<1x8x128xf32, #tpu.memory_space<vmem>>) attributes {dimension_semantics = [#tpu.dimension_semantics<parallel>], iteration_bounds = array<i64: 1>, scalar_prefetch = 0 : i64, scratch_operands = 0 : i64, tpu.core_type = #tpu.core_type<tc>, window_params = [{transform_indices = @transform_0, window_bounds = array<i64: 256, 32>}, {pipeline_mode = #tpu.pipeline_mode<synchronous>, transform_indices = @transform_1, window_bounds = array<i64: 32, 128>}, {transform_indices = @transform_2, window_bounds = array<i64: 256, 1>}, {transform_indices = @transform_3, window_bounds = array<i64: 256, 1>}, {transform_indices = @transform_4, window_bounds = array<i64: 1, 8, 128>}, {transform_indices = @transform_5, window_bounds = array<i64: 1, 8, 128>}]} {
    %c0 = arith.constant 0 : index
    %c0_0 = arith.constant 0 : index
    %0 = vector.load %arg1[%c0, %c0_0] : memref<256x32xbf16, #tpu.memory_space<vmem>>, vector<256x32xbf16>
    %c0_1 = arith.constant 0 : index
    %c0_2 = arith.constant 0 : index
    %1 = vector.load %arg2[%c0_1, %c0_2] : memref<32x128xbf16, #tpu.memory_space<vmem>>, vector<32x128xbf16>
    %cst = arith.constant dense<0.000000e+00> : vector<256x128xf32>
    %2 = tpu.matmul %0, %1, %cst {dimension_numbers = #tpu.dot_dimension_numbers<[1], [0], [0], [1], [0, 0, 1, 1], [], []>} : vector<256x32xbf16>, vector<32x128xbf16>, vector<256x128xf32> -> vector<256x128xf32>
    %cst_3 = arith.constant dense<0xFF800000> : vector<256xf32>
    %3 = vector.multi_reduction <maximumf>, %2, %cst_3 [1] : vector<256x128xf32> to vector<256xf32>
    %4 = vector.shape_cast %3 : vector<256xf32> to vector<256x1xf32>
    %5 = vector.broadcast %4 : vector<256x1xf32> to vector<256x128xf32>
    %6 = arith.subf %2, %5 : vector<256x128xf32>
    %7 = math.exp %6 : vector<256x128xf32>
    %cst_4 = arith.constant dense<0.000000e+00> : vector<256xf32>
    %8 = vector.multi_reduction <add>, %7, %cst_4 [1] : vector<256x128xf32> to vector<256xf32>
    %9 = vector.shape_cast %8 : vector<256xf32> to vector<256x1xf32>
    %10 = math.log %9 : vector<256x1xf32>
    %11 = arith.addf %10, %4 : vector<256x1xf32>
    %c0_5 = arith.constant 0 : index
    %c0_6 = arith.constant 0 : index
    %12 = vector.load %arg3[%c0_5, %c0_6] : memref<256x1xi32, #tpu.memory_space<vmem>>, vector<256x1xi32>
    %13 = tpu.iota {dimensions = array<i32: 1>} : vector<256x128xi32>
    %14 = vector.broadcast %12 : vector<256x1xi32> to vector<256x128xi32>
    %15 = arith.cmpi eq, %13, %14 : vector<256x128xi32>
    %cst_7 = arith.constant 0.000000e+00 : f32
    %16 = vector.broadcast %cst_7 : f32 to vector<256x128xf32>
    %17 = arith.select %15, %2, %16 : vector<256x128xi1>, vector<256x128xf32>
    %cst_8 = arith.constant dense<0.000000e+00> : vector<256xf32>
    %18 = vector.multi_reduction <add>, %17, %cst_8 [1] : vector<256x128xf32> to vector<256xf32>
    %19 = vector.shape_cast %18 : vector<256xf32> to vector<256x1xf32>
    %c0_9 = arith.constant 0 : index
    %c0_10 = arith.constant 0 : index
    %20 = vector.load %arg4[%c0_9, %c0_10] : memref<256x1xf32, #tpu.memory_space<vmem>>, vector<256x1xf32>
    %21 = arith.subf %11, %19 : vector<256x1xf32>
    %22 = arith.mulf %21, %20 : vector<256x1xf32>
    %23 = vector.shape_cast %22 : vector<256x1xf32> to vector<1x256x1xf32>
    %cst_11 = arith.constant dense<0.000000e+00> : vector<1xf32>
    %24 = vector.multi_reduction <add>, %23, %cst_11 [1, 2] : vector<1x256x1xf32> to vector<1xf32>
    %25 = vector.shape_cast %24 : vector<1xf32> to vector<1x1x1xf32>
    %26 = vector.extract %25[0, 0, 0] : f32 from vector<1x1x1xf32>
    %27 = vector.broadcast %26 : f32 to vector<1x8x128xf32>
    %c0_12 = arith.constant 0 : index
    %c0_13 = arith.constant 0 : index
    %c0_14 = arith.constant 0 : index
    %28 = vector.load %arg5[%c0_12, %c0_13, %c0_14] : memref<1x8x128xf32, #tpu.memory_space<vmem>>, vector<1x8x128xf32>
    tpu.vector_store %arg5[%c0_12, %c0_13, %c0_14], %27 {strides = array<i32>} : memref<1x8x128xf32, #tpu.memory_space<vmem>>, vector<1x8x128xf32>,
    %29 = vector.shape_cast %20 : vector<256x1xf32> to vector<1x256x1xf32>
    %cst_15 = arith.constant dense<0.000000e+00> : vector<1xf32>
    %30 = vector.multi_reduction <add>, %29, %cst_15 [1, 2] : vector<1x256x1xf32> to vector<1xf32>
    %31 = vector.shape_cast %30 : vector<1xf32> to vector<1x1x1xf32>
    %32 = vector.extract %31[0, 0, 0] : f32 from vector<1x1x1xf32>
    %33 = vector.broadcast %32 : f32 to vector<1x8x128xf32>
    %c0_16 = arith.constant 0 : index
    %c0_17 = arith.constant 0 : index
    %c0_18 = arith.constant 0 : index
    %34 = vector.load %arg6[%c0_16, %c0_17, %c0_18] : memref<1x8x128xf32, #tpu.memory_space<vmem>>, vector<1x8x128xf32>
    tpu.vector_store %arg6[%c0_16, %c0_17, %c0_18], %33 {strides = array<i32>} : memref<1x8x128xf32, #tpu.memory_space<vmem>>, vector<1x8x128xf32>,
    return
  }
  func.func @transform_0(%arg0: i32) -> (i32, i32) {
    %c0_i32 = arith.constant 0 : i32
    %c0_i32_0 = arith.constant 0 : i32
    return %arg0, %c0_i32 : i32, i32
  }
  func.func @transform_1(%arg0: i32) -> (i32, i32) {
    %c0_i32 = arith.constant 0 : i32
    %c0_i32_0 = arith.constant 0 : i32
    %c0_i32_1 = arith.constant 0 : i32
    return %c0_i32, %c0_i32_0 : i32, i32
  }
  func.func @transform_2(%arg0: i32) -> (i32, i32) {
    %c0_i32 = arith.constant 0 : i32
    %c0_i32_0 = arith.constant 0 : i32
    return %arg0, %c0_i32 : i32, i32
  }
  func.func @transform_3(%arg0: i32) -> (i32, i32) {
    %c0_i32 = arith.constant 0 : i32
    %c0_i32_0 = arith.constant 0 : i32
    return %arg0, %c0_i32 : i32, i32
  }
  func.func @transform_4(%arg0: i32) -> (i32, i32, i32) {
    %c0_i32 = arith.constant 0 : i32
    %c0_i32_0 = arith.constant 0 : i32
    %c0_i32_1 = arith.constant 0 : i32
    return %arg0, %c0_i32, %c0_i32_0 : i32, i32, i32
  }
  func.func @transform_5(%arg0: i32) -> (i32, i32, i32) {
    %c0_i32 = arith.constant 0 : i32
    %c0_i32_0 = arith.constant 0 : i32
    %c0_i32_1 = arith.constant 0 : i32
    return %arg0, %c0_i32, %c0_i32_0 : i32, i32, i32
  }
}

</mosaic_0001>

<llo_original>
// kernel: tpu_custom_call.1
$region0: #{tpu_custom_call.1}
  #allocation0 [shape = 'u32[]', space=smem, size = 0x4, offset = 0x4, fixed_abs, tag = 'smem constant byte address 0x4 - core index']
  #allocation1 [shape = 'u32[72,128]{1,0:T(1,128)}', space=vmem, size = 0x9000, scoped, tag = 'internal scratch']
  %s0 = inlined_call_operand.vmem [shape: bf16[256,32], index: 0, kind: input, shape index: {}]
  %s1 = inlined_call_operand.vmem [shape: bf16[32,128], index: 1, kind: input, shape index: {}]
  %s2 = inlined_call_operand.vmem [shape: s32[256,1], index: 2, kind: input, shape index: {}]
  %s3 = inlined_call_operand.vmem [shape: f32[256,1], index: 3, kind: input, shape index: {}]
  %s4 = inlined_call_operand.hbm [shape: f32[1,8,128], index: 4, kind: output, shape index: {0}]
  %s5 = inlined_call_operand.hbm [shape: f32[1,8,128], index: 5, kind: output, shape index: {1}]
  %6 = xla_tuple %s4, %s5
  %s7 = sld [smem:[#allocation0]]
  $region34: #{tpu_custom_call.1} parent=0
    _
  %s9 = ssub.s32 1, %s7
  %s10 = scalar_select 0, %s9, %s7
  $region1: #{tpu_custom_call.1} parent=0
    #allocation2 [shape = 'u8[4096]{0}', space=vmem, size = 0x1000, scoped, tag = 'output window, operand 0, single buffered']
    #allocation3 [shape = 's32[1]{0}', space=sflag, size = 0x4, scoped, tag = 'scoped memory for tpu_custom_call.1']
    #allocation4 [shape = 'u8[4096]{0}', space=vmem, size = 0x1000, scoped, tag = 'output window, operand 1, single buffered']
    #allocation5 [shape = 's32[1]{0}', space=sflag, size = 0x4, scoped, tag = 'scoped memory for tpu_custom_call.1']
    %11 = vsyncpa [#allocation3], 0
    %12 = vsyncpa [#allocation5], 0
    // Predicated region
    $region2: #{tpu_custom_call.1} parent=1 // pred_check
      _
    $region3: #{tpu_custom_call.1} parent=1 // pred_check_branch
      %14 = sbr.rel (0) target = $region5
    $region4: #{tpu_custom_call.1} parent=1 // pred_region
      _
    $region5: #{tpu_custom_call.1} parent=1 // pred_fallthru
      _
    // Predicated region
    $region6: #{tpu_custom_call.1} parent=1 // pred_check
      _
    $region7: #{tpu_custom_call.1} parent=1 // pred_check_branch
      %16 = sbr.rel (0) target = $region9
    $region8: #{tpu_custom_call.1} parent=1 // pred_region
      _
    $region9: #{tpu_custom_call.1} parent=1 // pred_fallthru
      _
    // Predicated region
    $region10: #{tpu_custom_call.1} parent=1 // pred_check
      _
    $region11: #{tpu_custom_call.1} parent=1 // pred_check_branch
      %18 = sbr.rel (0) target = $region13
    $region12: #{tpu_custom_call.1} parent=1 // pred_region
      _
    $region13: #{tpu_custom_call.1} parent=1 // pred_fallthru
      _
    // Predicated region
    $region14: #{tpu_custom_call.1} parent=1 // pred_check
      _
    $region15: #{tpu_custom_call.1} parent=1 // pred_check_branch
      %20 = sbr.rel (0) target = $region17
    $region16: #{tpu_custom_call.1} parent=1 // pred_region
      _
    $region17: #{tpu_custom_call.1} parent=1 // pred_fallthru
      _
    %v22 = vld [vmem:[%s0] sm:$0xf]
    %v23 = vld [vmem:[%s0 + $0x4] sm:$0xf]
    %v24 = vld [vmem:[%s0 + $0x8] sm:$0xf]
    %v25 = vld [vmem:[%s0 + $0xc] sm:$0xf]
    %v26 = vld [vmem:[%s0 + $0x10] sm:$0xf]
    %v27 = vld [vmem:[%s0 + $0x14] sm:$0xf]
    %v28 = vld [vmem:[%s0 + $0x18] sm:$0xf]
    %v29 = vld [vmem:[%s0 + $0x1c] sm:$0xf]
    %v30 = vld [vmem:[%s0 + $0x20] sm:$0xf]
    %v31 = vld [vmem:[%s0 + $0x24] sm:$0xf]
    %v32 = vld [vmem:[%s0 + $0x28] sm:$0xf]
    %v33 = vld [vmem:[%s0 + $0x2c] sm:$0xf]
    %v34 = vld [vmem:[%s0 + $0x30] sm:$0xf]
    %v35 = vld [vmem:[%s0 + $0x34] sm:$0xf]
    %v36 = vld [vmem:[%s0 + $0x38] sm:$0xf]
    %v37 = vld [vmem:[%s0 + $0x3c] sm:$0xf]
    %v38 = vld [vmem:[%s0 + $0x40] sm:$0xf]
    %v39 = vld [vmem:[%s0 + $0x44] sm:$0xf]
    %v40 = vld [vmem:[%s0 + $0x48] sm:$0xf]
    %v41 = vld [vmem:[%s0 + $0x4c] sm:$0xf]
    %v42 = vld [vmem:[%s0 + $0x50] sm:$0xf]
    %v43 = vld [vmem:[%s0 + $0x54] sm:$0xf]
    %v44 = vld [vmem:[%s0 + $0x58] sm:$0xf]
    %v45 = vld [vmem:[%s0 + $0x5c] sm:$0xf]
    %v46 = vld [vmem:[%s0 + $0x60] sm:$0xf]
    %v47 = vld [vmem:[%s0 + $0x64] sm:$0xf]
    %v48 = vld [vmem:[%s0 + $0x68] sm:$0xf]
    %v49 = vld [vmem:[%s0 + $0x6c] sm:$0xf]
    %v50 = vld [vmem:[%s0 + $0x70] sm:$0xf]
    %v51 = vld [vmem:[%s0 + $0x74] sm:$0xf]
    %v52 = vld [vmem:[%s0 + $0x78] sm:$0xf]
    %v53 = vld [vmem:[%s0 + $0x7c] sm:$0xf]
    %v54 = vld [vmem:[%s1] sm:$0xf]
    %v55 = vld [vmem:[%s1 + $0x4] sm:$0xf]
    %v56 = vld [vmem:[%s1 + $0x8] sm:$0xf]
    %v57 = vld [vmem:[%s1 + $0xc] sm:$0xf]
    %v90 = vunpack.c.l.b16 %v22
    %v91 = vunpack.c.l.b16 %v23
    %v92 = vunpack.c.l.b16 %v24
    %v93 = vunpack.c.l.b16 %v25
    %v94 = vunpack.c.l.b16 %v26
    %v95 = vunpack.c.l.b16 %v27
    %v96 = vunpack.c.l.b16 %v28
    %v97 = vunpack.c.l.b16 %v29
    %v98 = vunpack.c.l.b16 %v30
    %v99 = vunpack.c.l.b16 %v31
    %v100 = vunpack.c.l.b16 %v32
    %v101 = vunpack.c.l.b16 %v33
    %v102 = vunpack.c.l.b16 %v34
    %v103 = vunpack.c.l.b16 %v35
    %v104 = vunpack.c.l.b16 %v36
    %v105 = vunpack.c.l.b16 %v37
    %v106 = vunpack.c.l.b16 %v38
    %v107 = vunpack.c.l.b16 %v39
    %v108 = vunpack.c.l.b16 %v40
    %v109 = vunpack.c.l.b16 %v41
    %v110 = vunpack.c.l.b16 %v42
    %v111 = vunpack.c.l.b16 %v43
    %v112 = vunpack.c.l.b16 %v44
    %v113 = vunpack.c.l.b16 %v45
    %v114 = vunpack.c.l.b16 %v46
    %v115 = vunpack.c.l.b16 %v47
    %v116 = vunpack.c.l.b16 %v48
    %v117 = vunpack.c.l.b16 %v49
    %v118 = vunpack.c.l.b16 %v50
    %v119 = vunpack.c.l.b16 %v51
    %v120 = vunpack.c.l.b16 %v52
    %v121 = vunpack.c.l.b16 %v53
    %v122 = vpack.c.b16 %v91, %v90
    %v123 = vpack.c.b16 %v93, %v92
    %v124 = vpack.c.b16 %v95, %v94
    %v125 = vpack.c.b16 %v97, %v96
    %v126 = vpack.c.b16 %v99, %v98
    %v127 = vpack.c.b16 %v101, %v100
    %v128 = vpack.c.b16 %v103, %v102
    %v129 = vpack.c.b16 %v105, %v104
    %v130 = vpack.c.b16 %v107, %v106
    %v131 = vpack.c.b16 %v109, %v108
    %v132 = vpack.c.b16 %v111, %v110
    %v133 = vpack.c.b16 %v113, %v112
    %v134 = vpack.c.b16 %v115, %v114
    %v135 = vpack.c.b16 %v117, %v116
    %v136 = vpack.c.b16 %v119, %v118
    %v137 = vpack.c.b16 %v121, %v120
    %v142 = vunpack.c.l.b16 %v54
    %v143 = vunpack.c.l.b16 %v55
    %v144 = vunpack.c.l.b16 %v56
    %v145 = vunpack.c.l.b16 %v57
    %v146 = vpack.c.b16 %v143, %v142
    %v147 = vpack.c.b16 %v145, %v144
    %vm150 = vcmask 261120
    %v152 = vsel %vm150, %v122, 0
    %v155 = vsel %vm150, %v123, 0
    %v158 = vsel %vm150, %v124, 0
    %v161 = vsel %vm150, %v125, 0
    %v164 = vsel %vm150, %v126, 0
    %v167 = vsel %vm150, %v127, 0
    %v170 = vsel %vm150, %v128, 0
    %v173 = vsel %vm150, %v129, 0
    %v176 = vsel %vm150, %v130, 0
    %v179 = vsel %vm150, %v131, 0
    %v182 = vsel %vm150, %v132, 0
    %v185 = vsel %vm150, %v133, 0
    %v188 = vsel %vm150, %v134, 0
    %v191 = vsel %vm150, %v135, 0
    %v194 = vsel %vm150, %v136, 0
    %v197 = vsel %vm150, %v137, 0
    %199 = vmatpush.bf16.msra.mxu0 0
    %200 = vmatpush.bf16.msra.mxu0 0
    %201 = vmatpush.bf16.msra.mxu0 0
    %202 = vmatpush.bf16.msra.mxu0 0
    %203 = vmatpush.bf16.msra.mxu0 0
    %204 = vmatpush.bf16.msra.mxu0 0
    %205 = vmatpush.bf16.msra.mxu0 %v147
    %206 = vmatpush.bf16.msra.mxu0 %v146
    %207 = vmatmul.bf16.gmra.mxu0 %v152
    %v208 = vpop.f32.mrf.mxu0
    %v209 = vadd.f32 0.0, %v208
    %v210 = vpop.f32.mrf.mxu0
    %v211 = vadd.f32 0.0, %v210
    %212 = vmatmul.bf16.gmra.mxu0 %v155
    %v213 = vpop.f32.mrf.mxu0
    %v214 = vadd.f32 0.0, %v213
    %v215 = vpop.f32.mrf.mxu0
    %v216 = vadd.f32 0.0, %v215
    %217 = vmatmul.bf16.gmra.mxu0 %v158
    %v218 = vpop.f32.mrf.mxu0
    %v219 = vadd.f32 0.0, %v218
    %v220 = vpop.f32.mrf.mxu0
    %v221 = vadd.f32 0.0, %v220
    %222 = vmatmul.bf16.gmra.mxu0 %v161
    %v223 = vpop.f32.mrf.mxu0
    %v224 = vadd.f32 0.0, %v223
    %v225 = vpop.f32.mrf.mxu0
    %v226 = vadd.f32 0.0, %v225
    %227 = vmatmul.bf16.gmra.mxu0 %v164
    %v228 = vpop.f32.mrf.mxu0
    %v229 = vadd.f32 0.0, %v228
    %v230 = vpop.f32.mrf.mxu0
    %v231 = vadd.f32 0.0, %v230
    %232 = vmatmul.bf16.gmra.mxu0 %v167
    %v233 = vpop.f32.mrf.mxu0
    %v234 = vadd.f32 0.0, %v233
    %v235 = vpop.f32.mrf.mxu0
    %v236 = vadd.f32 0.0, %v235
    %237 = vmatmul.bf16.gmra.mxu0 %v170
    %v238 = vpop.f32.mrf.mxu0
    %v239 = vadd.f32 0.0, %v238
    %v240 = vpop.f32.mrf.mxu0
    %v241 = vadd.f32 0.0, %v240
    %242 = vmatmul.bf16.gmra.mxu0 %v173
    %v243 = vpop.f32.mrf.mxu0
    %v244 = vadd.f32 0.0, %v243
    %v245 = vpop.f32.mrf.mxu0
    %v246 = vadd.f32 0.0, %v245
    %247 = vmatmul.bf16.gmra.mxu0 %v176
    %v248 = vpop.f32.mrf.mxu0
    %v249 = vadd.f32 0.0, %v248
    %v250 = vpop.f32.mrf.mxu0
    %v251 = vadd.f32 0.0, %v250
    %252 = vmatmul.bf16.gmra.mxu0 %v179
    %v253 = vpop.f32.mrf.mxu0
    %v254 = vadd.f32 0.0, %v253
    %v255 = vpop.f32.mrf.mxu0
    %v256 = vadd.f32 0.0, %v255
    %257 = vmatmul.bf16.gmra.mxu0 %v182
    %v258 = vpop.f32.mrf.mxu0
    %v259 = vadd.f32 0.0, %v258
    %v260 = vpop.f32.mrf.mxu0
    %v261 = vadd.f32 0.0, %v260
    %262 = vmatmul.bf16.gmra.mxu0 %v185
    %v263 = vpop.f32.mrf.mxu0
    %v264 = vadd.f32 0.0, %v263
    %v265 = vpop.f32.mrf.mxu0
    %v266 = vadd.f32 0.0, %v265
    %267 = vmatmul.bf16.gmra.mxu0 %v188
    %v268 = vpop.f32.mrf.mxu0
    %v269 = vadd.f32 0.0, %v268
    %v270 = vpop.f32.mrf.mxu0
    %v271 = vadd.f32 0.0, %v270
    %272 = vmatmul.bf16.gmra.mxu0 %v191
    %v273 = vpop.f32.mrf.mxu0
    %v274 = vadd.f32 0.0, %v273
    %v275 = vpop.f32.mrf.mxu0
    %v276 = vadd.f32 0.0, %v275
    %277 = vmatmul.bf16.gmra.mxu0 %v194
    %v278 = vpop.f32.mrf.mxu0
    %v279 = vadd.f32 0.0, %v278
    %v280 = vpop.f32.mrf.mxu0
    %v281 = vadd.f32 0.0, %v280
    %282 = vmatmul.bf16.gmra.mxu0 %v197
    %v283 = vpop.f32.mrf.mxu0
    %v284 = vadd.f32 0.0, %v283
    %v285 = vpop.f32.mrf.mxu0
    %v286 = vadd.f32 0.0, %v285
    %287 = vdwg.mxu0
    %288 = vmax.xlane.f32.xlu0 %v209
    %v289 = vpop.xlane.xlu0 %288
    %290 = vmax.xlane.f32.xlu0 %v211
    %v291 = vpop.xlane.xlu0 %290
    %292 = vmax.xlane.f32.xlu0 %v214
    %v293 = vpop.xlane.xlu0 %292
    %294 = vmax.xlane.f32.xlu0 %v216
    %v295 = vpop.xlane.xlu0 %294
    %296 = vmax.xlane.f32.xlu0 %v219
    %v297 = vpop.xlane.xlu0 %296
    %298 = vmax.xlane.f32.xlu0 %v221
    %v299 = vpop.xlane.xlu0 %298
    %300 = vmax.xlane.f32.xlu0 %v224
    %v301 = vpop.xlane.xlu0 %300
    %302 = vmax.xlane.f32.xlu0 %v226
    %v303 = vpop.xlane.xlu0 %302
    %304 = vmax.xlane.f32.xlu0 %v229
    %v305 = vpop.xlane.xlu0 %304
    %306 = vmax.xlane.f32.xlu0 %v231
    %v307 = vpop.xlane.xlu0 %306
    %308 = vmax.xlane.f32.xlu0 %v234
    %v309 = vpop.xlane.xlu0 %308
    %310 = vmax.xlane.f32.xlu0 %v236
    %v311 = vpop.xlane.xlu0 %310
    %312 = vmax.xlane.f32.xlu0 %v239
    %v313 = vpop.xlane.xlu0 %312
    %314 = vmax.xlane.f32.xlu0 %v241
    %v315 = vpop.xlane.xlu0 %314
    %316 = vmax.xlane.f32.xlu0 %v244
    %v317 = vpop.xlane.xlu0 %316
    %318 = vmax.xlane.f32.xlu0 %v246
    %v319 = vpop.xlane.xlu0 %318
    %320 = vmax.xlane.f32.xlu0 %v249
    %v321 = vpop.xlane.xlu0 %320
    %322 = vmax.xlane.f32.xlu0 %v251
    %v323 = vpop.xlane.xlu0 %322
    %324 = vmax.xlane.f32.xlu0 %v254
    %v325 = vpop.xlane.xlu0 %324
    %326 = vmax.xlane.f32.xlu0 %v256
    %v327 = vpop.xlane.xlu0 %326
    %328 = vmax.xlane.f32.xlu0 %v259
    %v329 = vpop.xlane.xlu0 %328
    %330 = vmax.xlane.f32.xlu0 %v261
    %v331 = vpop.xlane.xlu0 %330
    %332 = vmax.xlane.f32.xlu0 %v264
    %v333 = vpop.xlane.xlu0 %332
    %334 = vmax.xlane.f32.xlu0 %v266
    %v335 = vpop.xlane.xlu0 %334
    %336 = vmax.xlane.f32.xlu0 %v269
    %v337 = vpop.xlane.xlu0 %336
    %338 = vmax.xlane.f32.xlu0 %v271
    %v339 = vpop.xlane.xlu0 %338
    %340 = vmax.xlane.f32.xlu0 %v274
    %v341 = vpop.xlane.xlu0 %340
    %342 = vmax.xlane.f32.xlu0 %v276
    %v343 = vpop.xlane.xlu0 %342
    %344 = vmax.xlane.f32.xlu0 %v279
    %v345 = vpop.xlane.xlu0 %344
    %346 = vmax.xlane.f32.xlu0 %v281
    %v347 = vpop.xlane.xlu0 %346
    %348 = vmax.xlane.f32.xlu0 %v284
    %v349 = vpop.xlane.xlu0 %348
    %350 = vmax.xlane.f32.xlu0 %v286
    %v351 = vpop.xlane.xlu0 %350
    %v352 = vsub.f32 %v209, %v289
    %v353 = vsub.f32 %v211, %v291
    %v354 = vsub.f32 %v214, %v293
    %v355 = vsub.f32 %v216, %v295
    %v356 = vsub.f32 %v219, %v297
    %v357 = vsub.f32 %v221, %v299
    %v358 = vsub.f32 %v224, %v301
    %v359 = vsub.f32 %v226, %v303
    %v360 = vsub.f32 %v229, %v305
    %v361 = vsub.f32 %v231, %v307
    %v362 = vsub.f32 %v234, %v309
    %v363 = vsub.f32 %v236, %v311
    %v364 = vsub.f32 %v239, %v313
    %v365 = vsub.f32 %v241, %v315
    %v366 = vsub.f32 %v244, %v317
    %v367 = vsub.f32 %v246, %v319
    %v368 = vsub.f32 %v249, %v321
    %v369 = vsub.f32 %v251, %v323
    %v370 = vsub.f32 %v254, %v325
    %v371 = vsub.f32 %v256, %v327
    %v372 = vsub.f32 %v259, %v329
    %v373 = vsub.f32 %v261, %v331
    %v374 = vsub.f32 %v264, %v333
    %v375 = vsub.f32 %v266, %v335
    %v376 = vsub.f32 %v269, %v337
    %v377 = vsub.f32 %v271, %v339
    %v378 = vsub.f32 %v274, %v341
    %v379 = vsub.f32 %v276, %v343
    %v380 = vsub.f32 %v279, %v345
    %v381 = vsub.f32 %v281, %v347
    %v382 = vsub.f32 %v284, %v349
    %v383 = vsub.f32 %v286, %v351
    %v384 = vmul.f32 %v352, 1.442695
    %v385 = vpow.pop %v384
    %v386 = vmul.f32 %v353, 1.442695
    %v387 = vpow.pop %v386
    %v388 = vmul.f32 %v354, 1.442695
    %v389 = vpow.pop %v388
    %v390 = vmul.f32 %v355, 1.442695
    %v391 = vpow.pop %v390
    %v392 = vmul.f32 %v356, 1.442695
    %v393 = vpow.pop %v392
    %v394 = vmul.f32 %v357, 1.442695
    %v395 = vpow.pop %v394
    %v396 = vmul.f32 %v358, 1.442695
    %v397 = vpow.pop %v396
    %v398 = vmul.f32 %v359, 1.442695
    %v399 = vpow.pop %v398
    %v400 = vmul.f32 %v360, 1.442695
    %v401 = vpow.pop %v400
    %v402 = vmul.f32 %v361, 1.442695
    %v403 = vpow.pop %v402
    %v404 = vmul.f32 %v362, 1.442695
    %v405 = vpow.pop %v404
    %v406 = vmul.f32 %v363, 1.442695
    %v407 = vpow.pop %v406
    %v408 = vmul.f32 %v364, 1.442695
    %v409 = vpow.pop %v408
    %v410 = vmul.f32 %v365, 1.442695
    %v411 = vpow.pop %v410
    %v412 = vmul.f32 %v366, 1.442695
    %v413 = vpow.pop %v412
    %v414 = vmul.f32 %v367, 1.442695
    %v415 = vpow.pop %v414
    %v416 = vmul.f32 %v368, 1.442695
    %v417 = vpow.pop %v416
    %v418 = vmul.f32 %v369, 1.442695
    %v419 = vpow.pop %v418
    %v420 = vmul.f32 %v370, 1.442695
    %v421 = vpow.pop %v420
    %v422 = vmul.f32 %v371, 1.442695
    %v423 = vpow.pop %v422
    %v424 = vmul.f32 %v372, 1.442695
    %v425 = vpow.pop %v424
    %v426 = vmul.f32 %v373, 1.442695
    %v427 = vpow.pop %v426
    %v428 = vmul.f32 %v374, 1.442695
    %v429 = vpow.pop %v428
    %v430 = vmul.f32 %v375, 1.442695
    %v431 = vpow.pop %v430
    %v432 = vmul.f32 %v376, 1.442695
    %v433 = vpow.pop %v432
    %v434 = vmul.f32 %v377, 1.442695
    %v435 = vpow.pop %v434
    %v436 = vmul.f32 %v378, 1.442695
    %v437 = vpow.pop %v436
    %v438 = vmul.f32 %v379, 1.442695
    %v439 = vpow.pop %v438
    %v440 = vmul.f32 %v380, 1.442695
    %v441 = vpow.pop %v440
    %v442 = vmul.f32 %v381, 1.442695
    %v443 = vpow.pop %v442
    %v444 = vmul.f32 %v382, 1.442695
    %v445 = vpow.pop %v444
    %v446 = vmul.f32 %v383, 1.442695
    %v447 = vpow.pop %v446
    %448 = vadd.xlane.f32.xlu0 %v385
    %v449 = vpop.xlane.xlu0 %448
    %450 = vadd.xlane.f32.xlu0 %v387
    %v451 = vpop.xlane.xlu0 %450
    %452 = vadd.xlane.f32.xlu0 %v389
    %v453 = vpop.xlane.xlu0 %452
    %454 = vadd.xlane.f32.xlu0 %v391
    %v455 = vpop.xlane.xlu0 %454
    %456 = vadd.xlane.f32.xlu0 %v393
    %v457 = vpop.xlane.xlu0 %456
    %458 = vadd.xlane.f32.xlu0 %v395
    %v459 = vpop.xlane.xlu0 %458
    %460 = vadd.xlane.f32.xlu0 %v397
    %v461 = vpop.xlane.xlu0 %460
    %462 = vadd.xlane.f32.xlu0 %v399
    %v463 = vpop.xlane.xlu0 %462
    %464 = vadd.xlane.f32.xlu0 %v401
    %v465 = vpop.xlane.xlu0 %464
    %466 = vadd.xlane.f32.xlu0 %v403
    %v467 = vpop.xlane.xlu0 %466
    %468 = vadd.xlane.f32.xlu0 %v405
    %v469 = vpop.xlane.xlu0 %468
    %470 = vadd.xlane.f32.xlu0 %v407
    %v471 = vpop.xlane.xlu0 %470
    %472 = vadd.xlane.f32.xlu0 %v409
    %v473 = vpop.xlane.xlu0 %472
    %474 = vadd.xlane.f32.xlu0 %v411
    %v475 = vpop.xlane.xlu0 %474
    %476 = vadd.xlane.f32.xlu0 %v413
    %v477 = vpop.xlane.xlu0 %476
    %478 = vadd.xlane.f32.xlu0 %v415
    %v479 = vpop.xlane.xlu0 %478
    %480 = vadd.xlane.f32.xlu0 %v417
    %v481 = vpop.xlane.xlu0 %480
    %482 = vadd.xlane.f32.xlu0 %v419
    %v483 = vpop.xlane.xlu0 %482
    %484 = vadd.xlane.f32.xlu0 %v421
    %v485 = vpop.xlane.xlu0 %484
    %486 = vadd.xlane.f32.xlu0 %v423
    %v487 = vpop.xlane.xlu0 %486
    %488 = vadd.xlane.f32.xlu0 %v425
    %v489 = vpop.xlane.xlu0 %488
    %490 = vadd.xlane.f32.xlu0 %v427
    %v491 = vpop.xlane.xlu0 %490
    %492 = vadd.xlane.f32.xlu0 %v429
    %v493 = vpop.xlane.xlu0 %492
    %494 = vadd.xlane.f32.xlu0 %v431
    %v495 = vpop.xlane.xlu0 %494
    %496 = vadd.xlane.f32.xlu0 %v433
    %v497 = vpop.xlane.xlu0 %496
    %498 = vadd.xlane.f32.xlu0 %v435
    %v499 = vpop.xlane.xlu0 %498
    %500 = vadd.xlane.f32.xlu0 %v437
    %v501 = vpop.xlane.xlu0 %500
    %502 = vadd.xlane.f32.xlu0 %v439
    %v503 = vpop.xlane.xlu0 %502
    %504 = vadd.xlane.f32.xlu0 %v441
    %v505 = vpop.xlane.xlu0 %504
    %506 = vadd.xlane.f32.xlu0 %v443
    %v507 = vpop.xlane.xlu0 %506
    %508 = vadd.xlane.f32.xlu0 %v445
    %v509 = vpop.xlane.xlu0 %508
    %510 = vadd.xlane.f32.xlu0 %v447
    %v511 = vpop.xlane.xlu0 %510
    %v512 = vlog2.pop %v449
    %v513 = vmul.f32 %v512, 0.6931472
    %v514 = vlog2.pop %v451
    %v515 = vmul.f32 %v514, 0.6931472
    %v516 = vlog2.pop %v453
    %v517 = vmul.f32 %v516, 0.6931472
    %v518 = vlog2.pop %v455
    %v519 = vmul.f32 %v518, 0.6931472
    %v520 = vlog2.pop %v457
    %v521 = vmul.f32 %v520, 0.6931472
    %v522 = vlog2.pop %v459
    %v523 = vmul.f32 %v522, 0.6931472
    %v524 = vlog2.pop %v461
    %v525 = vmul.f32 %v524, 0.6931472
    %v526 = vlog2.pop %v463
    %v527 = vmul.f32 %v526, 0.6931472
    %v528 = vlog2.pop %v465
    %v529 = vmul.f32 %v528, 0.6931472
    %v530 = vlog2.pop %v467
    %v531 = vmul.f32 %v530, 0.6931472
    %v532 = vlog2.pop %v469
    %v533 = vmul.f32 %v532, 0.6931472
    %v534 = vlog2.pop %v471
    %v535 = vmul.f32 %v534, 0.6931472
    %v536 = vlog2.pop %v473
    %v537 = vmul.f32 %v536, 0.6931472
    %v538 = vlog2.pop %v475
    %v539 = vmul.f32 %v538, 0.6931472
    %v540 = vlog2.pop %v477
    %v541 = vmul.f32 %v540, 0.6931472
    %v542 = vlog2.pop %v479
    %v543 = vmul.f32 %v542, 0.6931472
    %v544 = vlog2.pop %v481
    %v545 = vmul.f32 %v544, 0.6931472
    %v546 = vlog2.pop %v483
    %v547 = vmul.f32 %v546, 0.6931472
    %v548 = vlog2.pop %v485
    %v549 = vmul.f32 %v548, 0.6931472
    %v550 = vlog2.pop %v487
    %v551 = vmul.f32 %v550, 0.6931472
    %v552 = vlog2.pop %v489
    %v553 = vmul.f32 %v552, 0.6931472
    %v554 = vlog2.pop %v491
    %v555 = vmul.f32 %v554, 0.6931472
    %v556 = vlog2.pop %v493
    %v557 = vmul.f32 %v556, 0.6931472
    %v558 = vlog2.pop %v495
    %v559 = vmul.f32 %v558, 0.6931472
    %v560 = vlog2.pop %v497
    %v561 = vmul.f32 %v560, 0.6931472
    %v562 = vlog2.pop %v499
    %v563 = vmul.f32 %v562, 0.6931472
    %v564 = vlog2.pop %v501
    %v565 = vmul.f32 %v564, 0.6931472
    %v566 = vlog2.pop %v503
    %v567 = vmul.f32 %v566, 0.6931472
    %v568 = vlog2.pop %v505
    %v569 = vmul.f32 %v568, 0.6931472
    %v570 = vlog2.pop %v507
    %v571 = vmul.f32 %v570, 0.6931472
    %v572 = vlog2.pop %v509
    %v573 = vmul.f32 %v572, 0.6931472
    %v574 = vlog2.pop %v511
    %v575 = vmul.f32 %v574, 0.6931472
    %v576 = vadd.f32 %v513, %v289
    %v577 = vadd.f32 %v515, %v291
    %v578 = vadd.f32 %v517, %v293
    %v579 = vadd.f32 %v519, %v295
    %v580 = vadd.f32 %v521, %v297
    %v581 = vadd.f32 %v523, %v299
    %v582 = vadd.f32 %v525, %v301
    %v583 = vadd.f32 %v527, %v303
    %v584 = vadd.f32 %v529, %v305
    %v585 = vadd.f32 %v531, %v307
    %v586 = vadd.f32 %v533, %v309
    %v587 = vadd.f32 %v535, %v311
    %v588 = vadd.f32 %v537, %v313
    %v589 = vadd.f32 %v539, %v315
    %v590 = vadd.f32 %v541, %v317
    %v591 = vadd.f32 %v543, %v319
    %v592 = vadd.f32 %v545, %v321
    %v593 = vadd.f32 %v547, %v323
    %v594 = vadd.f32 %v549, %v325
    %v595 = vadd.f32 %v551, %v327
    %v596 = vadd.f32 %v553, %v329
    %v597 = vadd.f32 %v555, %v331
    %v598 = vadd.f32 %v557, %v333
    %v599 = vadd.f32 %v559, %v335
    %v600 = vadd.f32 %v561, %v337
    %v601 = vadd.f32 %v563, %v339
    %v602 = vadd.f32 %v565, %v341
    %v603 = vadd.f32 %v567, %v343
    %v604 = vadd.f32 %v569, %v345
    %v605 = vadd.f32 %v571, %v347
    %v606 = vadd.f32 %v573, %v349
    %v607 = vadd.f32 %v575, %v351
    %v608 = vld [vmem:[%s2] sm:$0xff]
    %v609 = vld [vmem:[%s2 + $0x8] sm:$0xff]
    %v610 = vld [vmem:[%s2 + $0x10] sm:$0xff]
    %v611 = vld [vmem:[%s2 + $0x18] sm:$0xff]
    %v612 = vld [vmem:[%s2 + $0x20] sm:$0xff]
    %v613 = vld [vmem:[%s2 + $0x28] sm:$0xff]
    %v614 = vld [vmem:[%s2 + $0x30] sm:$0xff]
    %v615 = vld [vmem:[%s2 + $0x38] sm:$0xff]
    %v616 = vld [vmem:[%s2 + $0x40] sm:$0xff]
    %v617 = vld [vmem:[%s2 + $0x48] sm:$0xff]
    %v618 = vld [vmem:[%s2 + $0x50] sm:$0xff]
    %v619 = vld [vmem:[%s2 + $0x58] sm:$0xff]
    %v620 = vld [vmem:[%s2 + $0x60] sm:$0xff]
    %v621 = vld [vmem:[%s2 + $0x68] sm:$0xff]
    %v622 = vld [vmem:[%s2 + $0x70] sm:$0xff]
    %v623 = vld [vmem:[%s2 + $0x78] sm:$0xff]
    %v624 = vld [vmem:[%s2 + $0x80] sm:$0xff]
    %v625 = vld [vmem:[%s2 + $0x88] sm:$0xff]
    %v626 = vld [vmem:[%s2 + $0x90] sm:$0xff]
    %v627 = vld [vmem:[%s2 + $0x98] sm:$0xff]
    %v628 = vld [vmem:[%s2 + $0xa0] sm:$0xff]
    %v629 = vld [vmem:[%s2 + $0xa8] sm:$0xff]
    %v630 = vld [vmem:[%s2 + $0xb0] sm:$0xff]
    %v631 = vld [vmem:[%s2 + $0xb8] sm:$0xff]
    %v632 = vld [vmem:[%s2 + $0xc0] sm:$0xff]
    %v633 = vld [vmem:[%s2 + $0xc8] sm:$0xff]
    %v634 = vld [vmem:[%s2 + $0xd0] sm:$0xff]
    %v635 = vld [vmem:[%s2 + $0xd8] sm:$0xff]
    %v636 = vld [vmem:[%s2 + $0xe0] sm:$0xff]
    %v637 = vld [vmem:[%s2 + $0xe8] sm:$0xff]
    %v638 = vld [vmem:[%s2 + $0xf0] sm:$0xff]
    %v639 = vld [vmem:[%s2 + $0xf8] sm:$0xff]
    %v640 = vlaneseq
    %v641 = vand.u32 %v640, 127
    %642 = vset.pattern.permute.xlu0 0
    %643 = vperm.xlu0 %642, %v608
    %v644 = vpop.permute.xlu0 %643
    %645 = vset.pattern.permute.xlu0 0
    %646 = vperm.xlu0 %645, %v609
    %v647 = vpop.permute.xlu0 %646
    %648 = vset.pattern.permute.xlu0 0
    %649 = vperm.xlu0 %648, %v610
    %v650 = vpop.permute.xlu0 %649
    %651 = vset.pattern.permute.xlu0 0
    %652 = vperm.xlu0 %651, %v611
    %v653 = vpop.permute.xlu0 %652
    %654 = vset.pattern.permute.xlu0 0
    %655 = vperm.xlu0 %654, %v612
    %v656 = vpop.permute.xlu0 %655
    %657 = vset.pattern.permute.xlu0 0
    %658 = vperm.xlu0 %657, %v613
    %v659 = vpop.permute.xlu0 %658
    %660 = vset.pattern.permute.xlu0 0
    %661 = vperm.xlu0 %660, %v614
    %v662 = vpop.permute.xlu0 %661
    %663 = vset.pattern.permute.xlu0 0
    %664 = vperm.xlu0 %663, %v615
    %v665 = vpop.permute.xlu0 %664
    %666 = vset.pattern.permute.xlu0 0
    %667 = vperm.xlu0 %666, %v616
    %v668 = vpop.permute.xlu0 %667
    %669 = vset.pattern.permute.xlu0 0
    %670 = vperm.xlu0 %669, %v617
    %v671 = vpop.permute.xlu0 %670
    %672 = vset.pattern.permute.xlu0 0
    %673 = vperm.xlu0 %672, %v618
    %v674 = vpop.permute.xlu0 %673
    %675 = vset.pattern.permute.xlu0 0
    %676 = vperm.xlu0 %675, %v619
    %v677 = vpop.permute.xlu0 %676
    %678 = vset.pattern.permute.xlu0 0
    %679 = vperm.xlu0 %678, %v620
    %v680 = vpop.permute.xlu0 %679
    %681 = vset.pattern.permute.xlu0 0
    %682 = vperm.xlu0 %681, %v621
    %v683 = vpop.permute.xlu0 %682
    %684 = vset.pattern.permute.xlu0 0
    %685 = vperm.xlu0 %684, %v622
    %v686 = vpop.permute.xlu0 %685
    %687 = vset.pattern.permute.xlu0 0
    %688 = vperm.xlu0 %687, %v623
    %v689 = vpop.permute.xlu0 %688
    %690 = vset.pattern.permute.xlu0 0
    %691 = vperm.xlu0 %690, %v624
    %v692 = vpop.permute.xlu0 %691
    %693 = vset.pattern.permute.xlu0 0
    %694 = vperm.xlu0 %693, %v625
    %v695 = vpop.permute.xlu0 %694
    %696 = vset.pattern.permute.xlu0 0
    %697 = vperm.xlu0 %696, %v626
    %v698 = vpop.permute.xlu0 %697
    %699 = vset.pattern.permute.xlu0 0
    %700 = vperm.xlu0 %699, %v627
    %v701 = vpop.permute.xlu0 %700
    %702 = vset.pattern.permute.xlu0 0
    %703 = vperm.xlu0 %702, %v628
    %v704 = vpop.permute.xlu0 %703
    %705 = vset.pattern.permute.xlu0 0
    %706 = vperm.xlu0 %705, %v629
    %v707 = vpop.permute.xlu0 %706
    %708 = vset.pattern.permute.xlu0 0
    %709 = vperm.xlu0 %708, %v630
    %v710 = vpop.permute.xlu0 %709
    %711 = vset.pattern.permute.xlu0 0
    %712 = vperm.xlu0 %711, %v631
    %v713 = vpop.permute.xlu0 %712
    %714 = vset.pattern.permute.xlu0 0
    %715 = vperm.xlu0 %714, %v632
    %v716 = vpop.permute.xlu0 %715
    %717 = vset.pattern.permute.xlu0 0
    %718 = vperm.xlu0 %717, %v633
    %v719 = vpop.permute.xlu0 %718
    %720 = vset.pattern.permute.xlu0 0
    %721 = vperm.xlu0 %720, %v634
    %v722 = vpop.permute.xlu0 %721
    %723 = vset.pattern.permute.xlu0 0
    %724 = vperm.xlu0 %723, %v635
    %v725 = vpop.permute.xlu0 %724
    %726 = vset.pattern.permute.xlu0 0
    %727 = vperm.xlu0 %726, %v636
    %v728 = vpop.permute.xlu0 %727
    %729 = vset.pattern.permute.xlu0 0
    %730 = vperm.xlu0 %729, %v637
    %v731 = vpop.permute.xlu0 %730
    %732 = vset.pattern.permute.xlu0 0
    %733 = vperm.xlu0 %732, %v638
    %v734 = vpop.permute.xlu0 %733
    %735 = vset.pattern.permute.xlu0 0
    %736 = vperm.xlu0 %735, %v639
    %v737 = vpop.permute.xlu0 %736
    %vm738 = vcmp.eq.s32.totalorder %v641, %v644
    %vm739 = vcmp.eq.s32.totalorder %v641, %v647
    %vm740 = vcmp.eq.s32.totalorder %v641, %v650
    %vm741 = vcmp.eq.s32.totalorder %v641, %v653
    %vm742 = vcmp.eq.s32.totalorder %v641, %v656
    %vm743 = vcmp.eq.s32.totalorder %v641, %v659
    %vm744 = vcmp.eq.s32.totalorder %v641, %v662
    %vm745 = vcmp.eq.s32.totalorder %v641, %v665
    %vm746 = vcmp.eq.s32.totalorder %v641, %v668
    %vm747 = vcmp.eq.s32.totalorder %v641, %v671
    %vm748 = vcmp.eq.s32.totalorder %v641, %v674
    %vm749 = vcmp.eq.s32.totalorder %v641, %v677
    %vm750 = vcmp.eq.s32.totalorder %v641, %v680
    %vm751 = vcmp.eq.s32.totalorder %v641, %v683
    %vm752 = vcmp.eq.s32.totalorder %v641, %v686
    %vm753 = vcmp.eq.s32.totalorder %v641, %v689
    %vm754 = vcmp.eq.s32.totalorder %v641, %v692
    %vm755 = vcmp.eq.s32.totalorder %v641, %v695
    %vm756 = vcmp.eq.s32.totalorder %v641, %v698
    %vm757 = vcmp.eq.s32.totalorder %v641, %v701
    %vm758 = vcmp.eq.s32.totalorder %v641, %v704
    %vm759 = vcmp.eq.s32.totalorder %v641, %v707
    %vm760 = vcmp.eq.s32.totalorder %v641, %v710
    %vm761 = vcmp.eq.s32.totalorder %v641, %v713
    %vm762 = vcmp.eq.s32.totalorder %v641, %v716
    %vm763 = vcmp.eq.s32.totalorder %v641, %v719
    %vm764 = vcmp.eq.s32.totalorder %v641, %v722
    %vm765 = vcmp.eq.s32.totalorder %v641, %v725
    %vm766 = vcmp.eq.s32.totalorder %v641, %v728
    %vm767 = vcmp.eq.s32.totalorder %v641, %v731
    %vm768 = vcmp.eq.s32.totalorder %v641, %v734
    %vm769 = vcmp.eq.s32.totalorder %v641, %v737
    %v770 = vsel %vm738, %v209, 0.0
    %v771 = vsel %vm739, %v211, 0.0
    %v772 = vsel %vm740, %v214, 0.0
    %v773 = vsel %vm741, %v216, 0.0
    %v774 = vsel %vm742, %v219, 0.0
    %v775 = vsel %vm743, %v221, 0.0
    %v776 = vsel %vm744, %v224, 0.0
    %v777 = vsel %vm745, %v226, 0.0
    %v778 = vsel %vm746, %v229, 0.0
    %v779 = vsel %vm747, %v231, 0.0
    %v780 = vsel %vm748, %v234, 0.0
    %v781 = vsel %vm749, %v236, 0.0
    %v782 = vsel %vm750, %v239, 0.0
    %v783 = vsel %vm751, %v241, 0.0
    %v784 = vsel %vm752, %v244, 0.0
    %v785 = vsel %vm753, %v246, 0.0
    %v786 = vsel %vm754, %v249, 0.0
    %v787 = vsel %vm755, %v251, 0.0
    %v788 = vsel %vm756, %v254, 0.0
    %v789 = vsel %vm757, %v256, 0.0
    %v790 = vsel %vm758, %v259, 0.0
    %v791 = vsel %vm759, %v261, 0.0
    %v792 = vsel %vm760, %v264, 0.0
    %v793 = vsel %vm761, %v266, 0.0
    %v794 = vsel %vm762, %v269, 0.0
    %v795 = vsel %vm763, %v271, 0.0
    %v796 = vsel %vm764, %v274, 0.0
    %v797 = vsel %vm765, %v276, 0.0
    %v798 = vsel %vm766, %v279, 0.0
    %v799 = vsel %vm767, %v281, 0.0
    %v800 = vsel %vm768, %v284, 0.0
    %v801 = vsel %vm769, %v286, 0.0
    %802 = vadd.xlane.f32.xlu0 %v770
    %v803 = vpop.xlane.xlu0 %802
    %804 = vadd.xlane.f32.xlu0 %v771
    %v805 = vpop.xlane.xlu0 %804
    %806 = vadd.xlane.f32.xlu0 %v772
    %v807 = vpop.xlane.xlu0 %806
    %808 = vadd.xlane.f32.xlu0 %v773
    %v809 = vpop.xlane.xlu0 %808
    %810 = vadd.xlane.f32.xlu0 %v774
    %v811 = vpop.xlane.xlu0 %810
    %812 = vadd.xlane.f32.xlu0 %v775
    %v813 = vpop.xlane.xlu0 %812
    %814 = vadd.xlane.f32.xlu0 %v776
    %v815 = vpop.xlane.xlu0 %814
    %816 = vadd.xlane.f32.xlu0 %v777
    %v817 = vpop.xlane.xlu0 %816
    %818 = vadd.xlane.f32.xlu0 %v778
    %v819 = vpop.xlane.xlu0 %818
    %820 = vadd.xlane.f32.xlu0 %v779
    %v821 = vpop.xlane.xlu0 %820
    %822 = vadd.xlane.f32.xlu0 %v780
    %v823 = vpop.xlane.xlu0 %822
    %824 = vadd.xlane.f32.xlu0 %v781
    %v825 = vpop.xlane.xlu0 %824
    %826 = vadd.xlane.f32.xlu0 %v782
    %v827 = vpop.xlane.xlu0 %826
    %828 = vadd.xlane.f32.xlu0 %v783
    %v829 = vpop.xlane.xlu0 %828
    %830 = vadd.xlane.f32.xlu0 %v784
    %v831 = vpop.xlane.xlu0 %830
    %832 = vadd.xlane.f32.xlu0 %v785
    %v833 = vpop.xlane.xlu0 %832
    %834 = vadd.xlane.f32.xlu0 %v786
    %v835 = vpop.xlane.xlu0 %834
    %836 = vadd.xlane.f32.xlu0 %v787
    %v837 = vpop.xlane.xlu0 %836
    %838 = vadd.xlane.f32.xlu0 %v788
    %v839 = vpop.xlane.xlu0 %838
    %840 = vadd.xlane.f32.xlu0 %v789
    %v841 = vpop.xlane.xlu0 %840
    %842 = vadd.xlane.f32.xlu0 %v790
    %v843 = vpop.xlane.xlu0 %842
    %844 = vadd.xlane.f32.xlu0 %v791
    %v845 = vpop.xlane.xlu0 %844
    %846 = vadd.xlane.f32.xlu0 %v792
    %v847 = vpop.xlane.xlu0 %846
    %848 = vadd.xlane.f32.xlu0 %v793
    %v849 = vpop.xlane.xlu0 %848
    %850 = vadd.xlane.f32.xlu0 %v794
    %v851 = vpop.xlane.xlu0 %850
    %852 = vadd.xlane.f32.xlu0 %v795
    %v853 = vpop.xlane.xlu0 %852
    %854 = vadd.xlane.f32.xlu0 %v796
    %v855 = vpop.xlane.xlu0 %854
    %856 = vadd.xlane.f32.xlu0 %v797
    %v857 = vpop.xlane.xlu0 %856
    %858 = vadd.xlane.f32.xlu0 %v798
    %v859 = vpop.xlane.xlu0 %858
    %860 = vadd.xlane.f32.xlu0 %v799
    %v861 = vpop.xlane.xlu0 %860
    %862 = vadd.xlane.f32.xlu0 %v800
    %v863 = vpop.xlane.xlu0 %862
    %864 = vadd.xlane.f32.xlu0 %v801
    %v865 = vpop.xlane.xlu0 %864
    %v866 = vld [vmem:[%s3] sm:$0xff]
    %v867 = vld [vmem:[%s3 + $0x8] sm:$0xff]
    %v868 = vld [vmem:[%s3 + $0x10] sm:$0xff]
    %v869 = vld [vmem:[%s3 + $0x18] sm:$0xff]
    %v870 = vld [vmem:[%s3 + $0x20] sm:$0xff]
    %v871 = vld [vmem:[%s3 + $0x28] sm:$0xff]
    %v872 = vld [vmem:[%s3 + $0x30] sm:$0xff]
    %v873 = vld [vmem:[%s3 + $0x38] sm:$0xff]
    %v874 = vld [vmem:[%s3 + $0x40] sm:$0xff]
    %v875 = vld [vmem:[%s3 + $0x48] sm:$0xff]
    %v876 = vld [vmem:[%s3 + $0x50] sm:$0xff]
    %v877 = vld [vmem:[%s3 + $0x58] sm:$0xff]
    %v878 = vld [vmem:[%s3 + $0x60] sm:$0xff]
    %v879 = vld [vmem:[%s3 + $0x68] sm:$0xff]
    %v880 = vld [vmem:[%s3 + $0x70] sm:$0xff]
    %v881 = vld [vmem:[%s3 + $0x78] sm:$0xff]
    %v882 = vld [vmem:[%s3 + $0x80] sm:$0xff]
    %v883 = vld [vmem:[%s3 + $0x88] sm:$0xff]
    %v884 = vld [vmem:[%s3 + $0x90] sm:$0xff]
    %v885 = vld [vmem:[%s3 + $0x98] sm:$0xff]
    %v886 = vld [vmem:[%s3 + $0xa0] sm:$0xff]
    %v887 = vld [vmem:[%s3 + $0xa8] sm:$0xff]
    %v888 = vld [vmem:[%s3 + $0xb0] sm:$0xff]
    %v889 = vld [vmem:[%s3 + $0xb8] sm:$0xff]
    %v890 = vld [vmem:[%s3 + $0xc0] sm:$0xff]
    %v891 = vld [vmem:[%s3 + $0xc8] sm:$0xff]
    %v892 = vld [vmem:[%s3 + $0xd0] sm:$0xff]
    %v893 = vld [vmem:[%s3 + $0xd8] sm:$0xff]
    %v894 = vld [vmem:[%s3 + $0xe0] sm:$0xff]
    %v895 = vld [vmem:[%s3 + $0xe8] sm:$0xff]
    %v896 = vld [vmem:[%s3 + $0xf0] sm:$0xff]
    %v897 = vld [vmem:[%s3 + $0xf8] sm:$0xff]
    %v898 = vsub.f32 %v576, %v803
    %v899 = vsub.f32 %v577, %v805
    %v900 = vsub.f32 %v578, %v807
    %v901 = vsub.f32 %v579, %v809
    %v902 = vsub.f32 %v580, %v811
    %v903 = vsub.f32 %v581, %v813
    %v904 = vsub.f32 %v582, %v815
    %v905 = vsub.f32 %v583, %v817
    %v906 = vsub.f32 %v584, %v819
    %v907 = vsub.f32 %v585, %v821
    %v908 = vsub.f32 %v586, %v823
    %v909 = vsub.f32 %v587, %v825
    %v910 = vsub.f32 %v588, %v827
    %v911 = vsub.f32 %v589, %v829
    %v912 = vsub.f32 %v590, %v831
    %v913 = vsub.f32 %v591, %v833
    %v914 = vsub.f32 %v592, %v835
    %v915 = vsub.f32 %v593, %v837
    %v916 = vsub.f32 %v594, %v839
    %v917 = vsub.f32 %v595, %v841
    %v918 = vsub.f32 %v596, %v843
    %v919 = vsub.f32 %v597, %v845
    %v920 = vsub.f32 %v598, %v847
    %v921 = vsub.f32 %v599, %v849
    %v922 = vsub.f32 %v600, %v851
    %v923 = vsub.f32 %v601, %v853
    %v924 = vsub.f32 %v602, %v855
    %v925 = vsub.f32 %v603, %v857
    %v926 = vsub.f32 %v604, %v859
    %v927 = vsub.f32 %v605, %v861
    %v928 = vsub.f32 %v606, %v863
    %v929 = vsub.f32 %v607, %v865
    %v930 = vmul.f32 %v898, %v866
    %v931 = vmul.f32 %v899, %v867
    %v932 = vmul.f32 %v900, %v868
    %v933 = vmul.f32 %v901, %v869
    %v934 = vmul.f32 %v902, %v870
    %v935 = vmul.f32 %v903, %v871
    %v936 = vmul.f32 %v904, %v872
    %v937 = vmul.f32 %v905, %v873
    %v938 = vmul.f32 %v906, %v874
    %v939 = vmul.f32 %v907, %v875
    %v940 = vmul.f32 %v908, %v876
    %v941 = vmul.f32 %v909, %v877
    %v942 = vmul.f32 %v910, %v878
    %v943 = vmul.f32 %v911, %v879
    %v944 = vmul.f32 %v912, %v880
    %v945 = vmul.f32 %v913, %v881
    %v946 = vmul.f32 %v914, %v882
    %v947 = vmul.f32 %v915, %v883
    %v948 = vmul.f32 %v916, %v884
    %v949 = vmul.f32 %v917, %v885
    %v950 = vmul.f32 %v918, %v886
    %v951 = vmul.f32 %v919, %v887
    %v952 = vmul.f32 %v920, %v888
    %v953 = vmul.f32 %v921, %v889
    %v954 = vmul.f32 %v922, %v890
    %v955 = vmul.f32 %v923, %v891
    %v956 = vmul.f32 %v924, %v892
    %v957 = vmul.f32 %v925, %v893
    %v958 = vmul.f32 %v926, %v894
    %v959 = vmul.f32 %v927, %v895
    %v960 = vmul.f32 %v928, %v896
    %v961 = vmul.f32 %v929, %v897
    %vm962 = vcmask 7168
    %v963 = vsel %vm962, %v930, 0.0
    %v964 = vsel %vm962, %v931, 0.0
    %v965 = vadd.f32 %v963, %v964
    %v966 = vsel %vm962, %v932, 0.0
    %v967 = vadd.f32 %v965, %v966
    %v968 = vsel %vm962, %v933, 0.0
    %v969 = vadd.f32 %v967, %v968
    %v970 = vsel %vm962, %v934, 0.0
    %v971 = vadd.f32 %v969, %v970
    %v972 = vsel %vm962, %v935, 0.0
    %v973 = vadd.f32 %v971, %v972
    %v974 = vsel %vm962, %v936, 0.0
    %v975 = vadd.f32 %v973, %v974
    %v976 = vsel %vm962, %v937, 0.0
    %v977 = vadd.f32 %v975, %v976
    %v978 = vsel %vm962, %v938, 0.0
    %v979 = vadd.f32 %v977, %v978
    %v980 = vsel %vm962, %v939, 0.0
    %v981 = vadd.f32 %v979, %v980
    %v982 = vsel %vm962, %v940, 0.0
    %v983 = vadd.f32 %v981, %v982
    %v984 = vsel %vm962, %v941, 0.0
    %v985 = vadd.f32 %v983, %v984
    %v986 = vsel %vm962, %v942, 0.0
    %v987 = vadd.f32 %v985, %v986
    %v988 = vsel %vm962, %v943, 0.0
    %v989 = vadd.f32 %v987, %v988
    %v990 = vsel %vm962, %v944, 0.0
    %v991 = vadd.f32 %v989, %v990
    %v992 = vsel %vm962, %v945, 0.0
    %v993 = vadd.f32 %v991, %v992
    %v994 = vsel %vm962, %v946, 0.0
    %v995 = vadd.f32 %v993, %v994
    %v996 = vsel %vm962, %v947, 0.0
    %v997 = vadd.f32 %v995, %v996
    %v998 = vsel %vm962, %v948, 0.0
    %v999 = vadd.f32 %v997, %v998
    %v1000 = vsel %vm962, %v949, 0.0
    %v1001 = vadd.f32 %v999, %v1000
    %v1002 = vsel %vm962, %v950, 0.0
    %v1003 = vadd.f32 %v1001, %v1002
    %v1004 = vsel %vm962, %v951, 0.0
    %v1005 = vadd.f32 %v1003, %v1004
    %v1006 = vsel %vm962, %v952, 0.0
    %v1007 = vadd.f32 %v1005, %v1006
    %v1008 = vsel %vm962, %v953, 0.0
    %v1009 = vadd.f32 %v1007, %v1008
    %v1010 = vsel %vm962, %v954, 0.0
    %v1011 = vadd.f32 %v1009, %v1010
    %v1012 = vsel %vm962, %v955, 0.0
    %v1013 = vadd.f32 %v1011, %v1012
    %v1014 = vsel %vm962, %v956, 0.0
    %v1015 = vadd.f32 %v1013, %v1014
    %v1016 = vsel %vm962, %v957, 0.0
    %v1017 = vadd.f32 %v1015, %v1016
    %v1018 = vsel %vm962, %v958, 0.0
    %v1019 = vadd.f32 %v1017, %v1018
    %v1020 = vsel %vm962, %v959, 0.0
    %v1021 = vadd.f32 %v1019, %v1020
    %v1022 = vsel %vm962, %v960, 0.0
    %v1023 = vadd.f32 %v1021, %v1022
    %v1024 = vsel %vm962, %v961, 0.0
    %v1025 = vadd.f32 %v1023, %v1024
    %1026 = vadd.xlane.f32.xlu0 %v1025
    %v1027 = vpop.xlane.xlu0 %1026
    %v1028 = vrot.slane %v1027, 4
    %v1029 = vadd.f32 %v1027, %v1028
    %v1030 = vrot.slane %v1029, 2
    %v1031 = vadd.f32 %v1029, %v1030
    %v1032 = vrot.slane %v1031, 1
    %v1033 = vadd.f32 %v1031, %v1032
    %s1034 = vtos %v1033
    %v1035 = vstv %s1034
    %1036 = vst [vmem:[#allocation2] sm:$0xff] %v1035
    %v1037 = vsel %vm962, %v866, 0.0
    %v1038 = vsel %vm962, %v867, 0.0
    %v1039 = vadd.f32 %v1037, %v1038
    %v1040 = vsel %vm962, %v868, 0.0
    %v1041 = vadd.f32 %v1039, %v1040
    %v1042 = vsel %vm962, %v869, 0.0
    %v1043 = vadd.f32 %v1041, %v1042
    %v1044 = vsel %vm962, %v870, 0.0
    %v1045 = vadd.f32 %v1043, %v1044
    %v1046 = vsel %vm962, %v871, 0.0
    %v1047 = vadd.f32 %v1045, %v1046
    %v1048 = vsel %vm962, %v872, 0.0
    %v1049 = vadd.f32 %v1047, %v1048
    %v1050 = vsel %vm962, %v873, 0.0
    %v1051 = vadd.f32 %v1049, %v1050
    %v1052 = vsel %vm962, %v874, 0.0
    %v1053 = vadd.f32 %v1051, %v1052
    %v1054 = vsel %vm962, %v875, 0.0
    %v1055 = vadd.f32 %v1053, %v1054
    %v1056 = vsel %vm962, %v876, 0.0
    %v1057 = vadd.f32 %v1055, %v1056
    %v1058 = vsel %vm962, %v877, 0.0
    %v1059 = vadd.f32 %v1057, %v1058
    %v1060 = vsel %vm962, %v878, 0.0
    %v1061 = vadd.f32 %v1059, %v1060
    %v1062 = vsel %vm962, %v879, 0.0
    %v1063 = vadd.f32 %v1061, %v1062
    %v1064 = vsel %vm962, %v880, 0.0
    %v1065 = vadd.f32 %v1063, %v1064
    %v1066 = vsel %vm962, %v881, 0.0
    %v1067 = vadd.f32 %v1065, %v1066
    %v1068 = vsel %vm962, %v882, 0.0
    %v1069 = vadd.f32 %v1067, %v1068
    %v1070 = vsel %vm962, %v883, 0.0
    %v1071 = vadd.f32 %v1069, %v1070
    %v1072 = vsel %vm962, %v884, 0.0
    %v1073 = vadd.f32 %v1071, %v1072
    %v1074 = vsel %vm962, %v885, 0.0
    %v1075 = vadd.f32 %v1073, %v1074
    %v1076 = vsel %vm962, %v886, 0.0
    %v1077 = vadd.f32 %v1075, %v1076
    %v1078 = vsel %vm962, %v887, 0.0
    %v1079 = vadd.f32 %v1077, %v1078
    %v1080 = vsel %vm962, %v888, 0.0
    %v1081 = vadd.f32 %v1079, %v1080
    %v1082 = vsel %vm962, %v889, 0.0
    %v1083 = vadd.f32 %v1081, %v1082
    %v1084 = vsel %vm962, %v890, 0.0
    %v1085 = vadd.f32 %v1083, %v1084
    %v1086 = vsel %vm962, %v891, 0.0
    %v1087 = vadd.f32 %v1085, %v1086
    %v1088 = vsel %vm962, %v892, 0.0
    %v1089 = vadd.f32 %v1087, %v1088
    %v1090 = vsel %vm962, %v893, 0.0
    %v1091 = vadd.f32 %v1089, %v1090
    %v1092 = vsel %vm962, %v894, 0.0
    %v1093 = vadd.f32 %v1091, %v1092
    %v1094 = vsel %vm962, %v895, 0.0
    %v1095 = vadd.f32 %v1093, %v1094
    %v1096 = vsel %vm962, %v896, 0.0
    %v1097 = vadd.f32 %v1095, %v1096
    %v1098 = vsel %vm962, %v897, 0.0
    %v1099 = vadd.f32 %v1097, %v1098
    %1100 = vadd.xlane.f32.xlu0 %v1099
    %v1101 = vpop.xlane.xlu0 %1100
    %v1102 = vrot.slane %v1101, 4
    %v1103 = vadd.f32 %v1101, %v1102
    %v1104 = vrot.slane %v1103, 2
    %v1105 = vadd.f32 %v1103, %v1104
    %v1106 = vrot.slane %v1105, 1
    %v1107 = vadd.f32 %v1105, %v1106
    %s1108 = vtos %v1107
    %v1109 = vstv %s1108
    %1110 = vst [vmem:[#allocation4] sm:$0xff] %v1109
    // Predicated region
    $region18: #{tpu_custom_call.1} parent=1 // pred_check
      _
    $region19: #{tpu_custom_call.1} parent=1 // pred_check_branch
      %1112 = sbr.rel (0) target = $region21
    $region20: #{tpu_custom_call.1} parent=1 // pred_region
      %1114 = vsyncadd [#allocation3], 0
      %s1116 = sshll.u32 [#allocation2], 4
      %s1117 = int_to_ptr.vmem [resolvable:$true] %s1116
      %s1118 = sshll.u32 %s4, 4
      %s1119 = int_to_ptr.hbm [resolvable:$true] %s1118
      %1121 = dma.vmem_to_hbm [thread:$0]  %s1117, 128, %s1119, [#allocation3]
    $region21: #{tpu_custom_call.1} parent=1 // pred_fallthru
      _
    // Predicated region
    $region22: #{tpu_custom_call.1} parent=1 // pred_check
      _
    $region23: #{tpu_custom_call.1} parent=1 // pred_check_branch
      %1123 = sbr.rel (0) target = $region25
    $region24: #{tpu_custom_call.1} parent=1 // pred_region
      %1125 = vsyncadd [#allocation5], 0
      %s1127 = sshll.u32 [#allocation4], 4
      %s1128 = int_to_ptr.vmem [resolvable:$true] %s1127
      %s1129 = sshll.u32 %s5, 4
      %s1130 = int_to_ptr.hbm [resolvable:$true] %s1129
      %1132 = dma.vmem_to_hbm [thread:$0]  %s1128, 128, %s1130, [#allocation5]
    $region25: #{tpu_custom_call.1} parent=1 // pred_fallthru
      _
    // Predicated region
    $region26: #{tpu_custom_call.1} parent=1 // pred_check
      _
    $region27: #{tpu_custom_call.1} parent=1 // pred_check_branch
      %1134 = sbr.rel (0) target = $region29
    $region28: #{tpu_custom_call.1} parent=1 // pred_region
      %1136 = dma.done [#allocation3], 128
    $region29: #{tpu_custom_call.1} parent=1 // pred_fallthru
      _
    // Predicated region
    $region30: #{tpu_custom_call.1} parent=1 // pred_check
      _
    $region31: #{tpu_custom_call.1} parent=1 // pred_check_branch
      %1138 = sbr.rel (0) target = $region33
    $region32: #{tpu_custom_call.1} parent=1 // pred_region
      %1140 = dma.done [#allocation5], 128
    $region33: #{tpu_custom_call.1} parent=1 // pred_fallthru
      _
    %1141 = vsyncpa [#allocation3], 1
    %1142 = vsyncpa [#allocation5], 1

</llo_original>
